<compile_context>
chip_gen: v6e
topology: v6e:2x2x1
jax: 0.10.0
libtpu: 0.0.40
codegen_flags: <defaults>
</compile_context>

<pallas_src>
import jax
import jax.numpy as jnp
from jax import lax
from jax.experimental import pallas as pl
from jax.experimental.pallas import tpu as pltpu

BN_EPS = 1e-5
LRELU_SLOPE = 0.2
H1, H2 = 512, 256  # hidden widths fixed by the module


def _round_up(x, m):
    return ((x + m - 1) // m) * m


def _lrelu(h):
    # slope < 1  =>  LeakyReLU(h) == max(h, slope*h)
    return jnp.maximum(h, LRELU_SLOPE * h)


def _make_hidden_kernel(batch, batch_pad):
    """Prologue kernel: z -> Linear -> BN -> LReLU -> Linear -> BN -> LReLU."""
    inv_n = 1.0 / float(batch)
    need_mask = batch_pad != batch

    def _bn_fold(h, gamma, beta, stats_h):
        # Training-mode BatchNorm1d folded into one scale/shift FMA.
        mu = jnp.sum(stats_h, axis=0, keepdims=True) * inv_n
        ex2 = jnp.sum(stats_h * stats_h, axis=0, keepdims=True) * inv_n
        var = jnp.maximum(ex2 - mu * mu, 0.0)   # guard E[x^2]-mu^2 cancellation
        scale = gamma * lax.rsqrt(var + BN_EPS)
        shift = beta - mu * scale
        return h * scale + shift

    def kernel(z_ref, w1_ref, g1_ref, be1_ref, w2_ref, g2_ref, be2_ref, h2_ref):
        z = z_ref[...]

        # Linear(latent, 512); bias dropped (cancelled by BN mean subtraction).
        h = jnp.dot(z, w1_ref[...], preferred_element_type=jnp.float32)
        # Padded z rows are zero and the bias is dropped -> padded rows of h
        # are exactly zero, so the batch statistics need no row mask here.
        h = _lrelu(_bn_fold(h, g1_ref[...], be1_ref[...], h))

        # Linear(512, 256); bias dropped again.
        h = jnp.dot(h, w2_ref[...], preferred_element_type=jnp.float32)
        if need_mask:
            rows = lax.broadcasted_iota(jnp.int32, (batch_pad, 1), 0)
            mask = (rows < batch).astype(jnp.float32)
            stats_h = h * mask              # padded rows are non-zero by now
        else:
            stats_h = h
        h = _lrelu(_bn_fold(h, g2_ref[...], be2_ref[...], stats_h))

        h2_ref[...] = h

    return kernel


def _stream_kernel(h2_ref, w3_ref, b3_ref, o_ref):
    """Per-P-tile: tanh(h2 @ w3_tile + b3_tile)."""
    h = jnp.dot(h2_ref[...], w3_ref[...], preferred_element_type=jnp.float32)
    o_ref[...] = jnp.tanh(h + b3_ref[...])


def prepare_params(params, latent_dim, input_shape, *, tn=2048):
    """One-time weight padding / tiling prep (keeps the forward pad-free for w3)."""
    (w1, b1, g1, be1, w2, b2, g2, be2, w3, b3) = params
    del b1, b2  # cancelled exactly by training-mode BatchNorm mean subtraction

    P = 1
    for d in input_shape:
        P *= int(d)
    L = int(latent_dim)
    L_pad = _round_up(L, 128)
    TN = min(int(tn), _round_up(P, 128))       # output-feature tile width
    P_pad = _round_up(P, TN)

    w1_p = jnp.pad(w1, ((0, L_pad - L), (0, 0)))
    w3_p = jnp.pad(w3, ((0, 0), (0, P_pad - P)))
    b3_p = jnp.pad(b3, ((0, 0), (0, P_pad - P)))

    return dict(w1=w1_p, g1=g1, be1=be1, w2=w2, g2=g2, be2=be2,
                w3=w3_p, b3=b3_p,
                L=L, L_pad=L_pad, P=P, P_pad=P_pad, TN=TN)


def generator_forward(z, prepared, input_shape):
    """z: (B, latent_dim) float32. Returns (B, *input_shape) float32."""
    B, L = z.shape
    assert L == prepared["L"], "z feature dim mismatch with prepared params"
    L_pad = prepared["L_pad"]
    P, P_pad, TN = prepared["P"], prepared["P_pad"], prepared["TN"]
    B_pad = _round_up(B, 8)
    num_tiles = P_pad // TN

    z_p = jnp.pad(z, ((0, B_pad - B), (0, L_pad - L)))

    def whole(shape):
        return pl.BlockSpec(shape, lambda j: (0,) * len(shape))

    # ---- Prologue: hidden path computed exactly once -> h2 (B_pad, 256) ----
    hidden_kernel = _make_hidden_kernel(B, B_pad)
    h2 = pl.pallas_call(
        hidden_kernel,
        out_shape=jax.ShapeDtypeStruct((B_pad, H2), jnp.float32),
        grid=(1,),
        in_specs=[
            whole((B_pad, L_pad)),   # z
            whole((L_pad, H1)),      # w1
            whole((1, H1)),          # gamma1
            whole((1, H1)),          # beta1
            whole((H1, H2)),         # w2
            whole((1, H2)),          # gamma2
            whole((1, H2)),          # beta2
        ],
        out_specs=whole((B_pad, H2)),
        compiler_params=pltpu.CompilerParams(
            dimension_semantics=("arbitrary",),
        ),
        cost_estimate=pl.CostEstimate(
            flops=2 * B_pad * (L_pad * H1 + H1 * H2),
            transcendentals=2 * (H1 + H2),
            bytes_accessed=4 * (B_pad * L_pad + L_pad * H1 + H1 * H2
                                + 2 * (H1 + H2) + B_pad * H2),
        ),
    )(z_p, prepared["w1"], prepared["g1"], prepared["be1"],
      prepared["w2"], prepared["g2"], prepared["be2"])

    # ---- Streamed w3 matmul + tanh, tiled over the output features ----
    w3_kwargs = {}
    if num_tiles >= 3:
        # Deeper pipelining on the only streamed HBM operand keeps the DMA
        # stream continuous now that per-tile compute is a single small matmul.
        w3_kwargs["pipeline_mode"] = pl.Buffered(3)

    out_flat = pl.pallas_call(
        _stream_kernel,
        out_shape=jax.ShapeDtypeStruct((B_pad, P_pad), jnp.float32),
        grid=(num_tiles,),
        in_specs=[
            pl.BlockSpec((B_pad, H2), lambda j: (0, 0)),              # h2 (resident)
            pl.BlockSpec((H2, TN), lambda j: (0, j), **w3_kwargs),    # w3 tile (streamed)
            pl.BlockSpec((1, TN), lambda j: (0, j)),                  # b3 tile
        ],
        out_specs=pl.BlockSpec((B_pad, TN), lambda j: (0, j)),
        compiler_params=pltpu.CompilerParams(
            dimension_semantics=("parallel",),
            vmem_limit_bytes=32 * 1024 * 1024,
        ),
        cost_estimate=pl.CostEstimate(
            flops=2 * B_pad * H2 * P_pad,
            transcendentals=B_pad * P_pad,
            bytes_accessed=4 * (B_pad * H2 + H2 * P_pad + P_pad + B_pad * P_pad),
        ),
    )(h2, prepared["w3"], prepared["b3"])

    return out_flat[:B, :P].reshape((B,) + tuple(input_shape))


def generator_reference(z, params, input_shape):
    """Pure-JAX reference matching the PyTorch training-mode forward."""
    (w1, b1, g1, be1, w2, b2, g2, be2, w3, b3) = params

    def bn(h, g, b):
        mu = jnp.mean(h, axis=0, keepdims=True)
        var = jnp.mean((h - mu) ** 2, axis=0, keepdims=True)
        return (h - mu) / jnp.sqrt(var + BN_EPS) * g + b

    h = z @ w1 + b1
    h = bn(h, g1, be1)
    h = jnp.where(h > 0, h, LRELU_SLOPE * h)
    h = h @ w2 + b2
    h = bn(h, g2, be2)
    h = jnp.where(h > 0, h, LRELU_SLOPE * h)
    h = h @ w3 + b3
    return jnp.tanh(h).reshape((z.shape[0],) + tuple(input_shape))


def init_params(key, latent_dim, input_shape):
    P = 1
    for d in input_shape:
        P *= int(d)
    dims = [(latent_dim, H1), (H1, H2), (H2, P)]
    keys = jax.random.split(key, 6)
    params = []
    for i, (din, dout) in enumerate(dims):
        bound = 1.0 / (din ** 0.5)
        w = jax.random.uniform(keys[2 * i], (din, dout), jnp.float32,
                               minval=-bound, maxval=bound)
        b = jax.random.uniform(keys[2 * i + 1], (1, dout), jnp.float32,
                               minval=-bound, maxval=bound)
        params.append((w, b))
    (w1, b1), (w2, b2), (w3, b3) = params
    # BatchNorm affine params (PyTorch default init: gamma=1, beta=0)
    g1 = jnp.ones((1, H1), jnp.float32)
    be1 = jnp.zeros((1, H1), jnp.float32)
    g2 = jnp.ones((1, H2), jnp.float32)
    be2 = jnp.zeros((1, H2), jnp.float32)
    return (w1, b1, g1, be1, w2, b2, g2, be2, w3, b3)


if __name__ == "__main__":
    # Small shapes consistent with the module: latent=100 (as in the spec),
    # input_shape=(1, 10, 40) -> 400 output features (stand-in for the huge
    # (1, n_mels, time_steps)).  tn=128 is passed to force a multi-tile
    # streaming grid (4 tiles, ragged P padding, Buffered(3)) even at this
    # tiny size, so the production code path is exercised.
    latent_dim = 100
    input_shape = (1, 10, 40)
    batch = 5

    key = jax.random.PRNGKey(0)
    kz, kp = jax.random.split(key)

    z = jax.random.normal(kz, (batch, latent_dim), dtype=jnp.float32)
    params = init_params(kp, latent_dim, input_shape)

    prepared = prepare_params(params, latent_dim, input_shape, tn=128)

    out = generator_forward(z, prepared, input_shape)
    out = jax.block_until_ready(out)

    assert out.shape == (batch,) + input_shape
    assert bool(jnp.all(jnp.isfinite(out)))
    assert bool(jnp.all(jnp.abs(out) <= 1.0))  # tanh output range

    # Compare against the pure-JAX reference (loose tol for MXU f32 matmul paths).
    ref = generator_reference(z, params, input_shape)
    max_err = float(jnp.max(jnp.abs(out - ref)))
    assert max_err < 5e-2, f"max abs error vs reference too large: {max_err}"

    print("KERNEL_OK")
</pallas_src>

<mosaic_0001>
module attributes {stable_mosaic.version = 11 : i64} {
  func.func @kernel(%arg0: i32, %arg1: memref<8x128xf32, #tpu.memory_space<vmem>>, %arg2: memref<128x512xf32, #tpu.memory_space<vmem>>, %arg3: memref<1x512xf32, #tpu.memory_space<vmem>>, %arg4: memref<1x512xf32, #tpu.memory_space<vmem>>, %arg5: memref<512x256xf32, #tpu.memory_space<vmem>>, %arg6: memref<1x256xf32, #tpu.memory_space<vmem>>, %arg7: memref<1x256xf32, #tpu.memory_space<vmem>>, %arg8: memref<8x256xf32, #tpu.memory_space<vmem>>) attributes {dimension_semantics = [#tpu.dimension_semantics<arbitrary>], iteration_bounds = array<i64: 1>, scalar_prefetch = 0 : i64, scratch_operands = 0 : i64, tpu.core_type = #tpu.core_type<tc>, window_params = [{pipeline_mode = #tpu.pipeline_mode<synchronous>, transform_indices = @transform_0, window_bounds = array<i64: 8, 128>}, {pipeline_mode = #tpu.pipeline_mode<synchronous>, transform_indices = @transform_1, window_bounds = array<i64: 128, 512>}, {pipeline_mode = #tpu.pipeline_mode<synchronous>, transform_indices = @transform_2, window_bounds = array<i64: 1, 512>}, {pipeline_mode = #tpu.pipeline_mode<synchronous>, transform_indices = @transform_3, window_bounds = array<i64: 1, 512>}, {pipeline_mode = #tpu.pipeline_mode<synchronous>, transform_indices = @transform_4, window_bounds = array<i64: 512, 256>}, {pipeline_mode = #tpu.pipeline_mode<synchronous>, transform_indices = @transform_5, window_bounds = array<i64: 1, 256>}, {pipeline_mode = #tpu.pipeline_mode<synchronous>, transform_indices = @transform_6, window_bounds = array<i64: 1, 256>}, {pipeline_mode = #tpu.pipeline_mode<synchronous>, transform_indices = @transform_7, window_bounds = array<i64: 8, 256>}]} {
    %c0 = arith.constant 0 : index
    %c0_0 = arith.constant 0 : index
    %0 = vector.load %arg1[%c0, %c0_0] : memref<8x128xf32, #tpu.memory_space<vmem>>, vector<8x128xf32>
    %c0_1 = arith.constant 0 : index
    %c0_2 = arith.constant 0 : index
    %1 = vector.load %arg2[%c0_1, %c0_2] : memref<128x512xf32, #tpu.memory_space<vmem>>, vector<128x512xf32>
    %cst = arith.constant dense<0.000000e+00> : vector<8x512xf32>
    %2 = tpu.matmul %0, %1, %cst {dimension_numbers = #tpu.dot_dimension_numbers<[1], [0], [0], [1], [0, 0, 1, 1], [], []>} : vector<8x128xf32>, vector<128x512xf32>, vector<8x512xf32> -> vector<8x512xf32>
    %c0_3 = arith.constant 0 : index
    %c0_4 = arith.constant 0 : index
    %3 = vector.load %arg3[%c0_3, %c0_4] : memref<1x512xf32, #tpu.memory_space<vmem>>, vector<1x512xf32>
    %c0_5 = arith.constant 0 : index
    %c0_6 = arith.constant 0 : index
    %4 = vector.load %arg4[%c0_5, %c0_6] : memref<1x512xf32, #tpu.memory_space<vmem>>, vector<1x512xf32>
    %cst_7 = arith.constant dense<0.000000e+00> : vector<512xf32>
    %5 = vector.multi_reduction <add>, %2, %cst_7 [0] : vector<8x512xf32> to vector<512xf32>
    %6 = vector.shape_cast %5 : vector<512xf32> to vector<1x512xf32>
    %cst_8 = arith.constant 2.000000e-01 : f32
    %7 = vector.broadcast %cst_8 : f32 to vector<1x512xf32>
    %8 = arith.mulf %6, %7 : vector<1x512xf32>
    %9 = arith.mulf %2, %2 : vector<8x512xf32>
    %cst_9 = arith.constant dense<0.000000e+00> : vector<512xf32>
    %10 = vector.multi_reduction <add>, %9, %cst_9 [0] : vector<8x512xf32> to vector<512xf32>
    %11 = vector.shape_cast %10 : vector<512xf32> to vector<1x512xf32>
    %cst_10 = arith.constant 2.000000e-01 : f32
    %12 = vector.broadcast %cst_10 : f32 to vector<1x512xf32>
    %13 = arith.mulf %11, %12 : vector<1x512xf32>
    %14 = arith.mulf %8, %8 : vector<1x512xf32>
    %15 = arith.subf %13, %14 : vector<1x512xf32>
    %cst_11 = arith.constant 0.000000e+00 : f32
    %16 = vector.broadcast %cst_11 : f32 to vector<1x512xf32>
    %17 = arith.maximumf %15, %16 : vector<1x512xf32>
    %cst_12 = arith.constant 9.99999974E-6 : f32
    %18 = vector.broadcast %cst_12 : f32 to vector<1x512xf32>
    %19 = arith.addf %17, %18 : vector<1x512xf32>
    %20 = math.rsqrt %19 : vector<1x512xf32>
    %21 = arith.mulf %3, %20 : vector<1x512xf32>
    %22 = arith.mulf %8, %21 : vector<1x512xf32>
    %23 = arith.subf %4, %22 : vector<1x512xf32>
    %24 = vector.broadcast %21 : vector<1x512xf32> to vector<8x512xf32>
    %25 = arith.mulf %2, %24 : vector<8x512xf32>
    %26 = vector.broadcast %23 : vector<1x512xf32> to vector<8x512xf32>
    %27 = arith.addf %25, %26 : vector<8x512xf32>
    %cst_13 = arith.constant 2.000000e-01 : f32
    %28 = vector.broadcast %cst_13 : f32 to vector<8x512xf32>
    %29 = arith.mulf %28, %27 : vector<8x512xf32>
    %30 = arith.maximumf %27, %29 : vector<8x512xf32>
    %c0_14 = arith.constant 0 : index
    %c0_15 = arith.constant 0 : index
    %31 = vector.load %arg5[%c0_14, %c0_15] : memref<512x256xf32, #tpu.memory_space<vmem>>, vector<512x256xf32>
    %cst_16 = arith.constant dense<0.000000e+00> : vector<8x256xf32>
    %32 = tpu.matmul %30, %31, %cst_16 {dimension_numbers = #tpu.dot_dimension_numbers<[1], [0], [0], [1], [0, 0, 1, 1], [], []>} : vector<8x512xf32>, vector<512x256xf32>, vector<8x256xf32> -> vector<8x256xf32>
    %33 = tpu.iota {dimensions = array<i32: 0>} : vector<8x1xi32>
    %c5_i32 = arith.constant 5 : i32
    %34 = vector.broadcast %c5_i32 : i32 to vector<8x1xi32>
    %35 = arith.cmpi slt, %33, %34 : vector<8x1xi32>
    %36 = arith.extui %35 : vector<8x1xi1> to vector<8x1xi32>
    %37 = arith.sitofp %36 : vector<8x1xi32> to vector<8x1xf32>
    %38 = vector.broadcast %37 : vector<8x1xf32> to vector<8x256xf32>
    %39 = arith.mulf %32, %38 : vector<8x256xf32>
    %c0_17 = arith.constant 0 : index
    %c0_18 = arith.constant 0 : index
    %40 = vector.load %arg6[%c0_17, %c0_18] : memref<1x256xf32, #tpu.memory_space<vmem>>, vector<1x256xf32>
    %c0_19 = arith.constant 0 : index
    %c0_20 = arith.constant 0 : index
    %41 = vector.load %arg7[%c0_19, %c0_20] : memref<1x256xf32, #tpu.memory_space<vmem>>, vector<1x256xf32>
    %cst_21 = arith.constant dense<0.000000e+00> : vector<256xf32>
    %42 = vector.multi_reduction <add>, %39, %cst_21 [0] : vector<8x256xf32> to vector<256xf32>
    %43 = vector.shape_cast %42 : vector<256xf32> to vector<1x256xf32>
    %cst_22 = arith.constant 2.000000e-01 : f32
    %44 = vector.broadcast %cst_22 : f32 to vector<1x256xf32>
    %45 = arith.mulf %43, %44 : vector<1x256xf32>
    %46 = arith.mulf %39, %39 : vector<8x256xf32>
    %cst_23 = arith.constant dense<0.000000e+00> : vector<256xf32>
    %47 = vector.multi_reduction <add>, %46, %cst_23 [0] : vector<8x256xf32> to vector<256xf32>
    %48 = vector.shape_cast %47 : vector<256xf32> to vector<1x256xf32>
    %cst_24 = arith.constant 2.000000e-01 : f32
    %49 = vector.broadcast %cst_24 : f32 to vector<1x256xf32>
    %50 = arith.mulf %48, %49 : vector<1x256xf32>
    %51 = arith.mulf %45, %45 : vector<1x256xf32>
    %52 = arith.subf %50, %51 : vector<1x256xf32>
    %cst_25 = arith.constant 0.000000e+00 : f32
    %53 = vector.broadcast %cst_25 : f32 to vector<1x256xf32>
    %54 = arith.maximumf %52, %53 : vector<1x256xf32>
    %cst_26 = arith.constant 9.99999974E-6 : f32
    %55 = vector.broadcast %cst_26 : f32 to vector<1x256xf32>
    %56 = arith.addf %54, %55 : vector<1x256xf32>
    %57 = math.rsqrt %56 : vector<1x256xf32>
    %58 = arith.mulf %40, %57 : vector<1x256xf32>
    %59 = arith.mulf %45, %58 : vector<1x256xf32>
    %60 = arith.subf %41, %59 : vector<1x256xf32>
    %61 = vector.broadcast %58 : vector<1x256xf32> to vector<8x256xf32>
    %62 = arith.mulf %32, %61 : vector<8x256xf32>
    %63 = vector.broadcast %60 : vector<1x256xf32> to vector<8x256xf32>
    %64 = arith.addf %62, %63 : vector<8x256xf32>
    %cst_27 = arith.constant 2.000000e-01 : f32
    %65 = vector.broadcast %cst_27 : f32 to vector<8x256xf32>
    %66 = arith.mulf %65, %64 : vector<8x256xf32>
    %67 = arith.maximumf %64, %66 : vector<8x256xf32>
    %c0_28 = arith.constant 0 : index
    %c0_29 = arith.constant 0 : index
    %68 = vector.load %arg8[%c0_28, %c0_29] : memref<8x256xf32, #tpu.memory_space<vmem>>, vector<8x256xf32>
    tpu.vector_store %arg8[%c0_28, %c0_29], %67 {strides = array<i32>} : memref<8x256xf32, #tpu.memory_space<vmem>>, vector<8x256xf32>,
    return
  }
  func.func @transform_0(%arg0: i32) -> (i32, i32) {
    %c0_i32 = arith.constant 0 : i32
    %c0_i32_0 = arith.constant 0 : i32
    %c0_i32_1 = arith.constant 0 : i32
    return %c0_i32, %c0_i32_0 : i32, i32
  }
  func.func @transform_1(%arg0: i32) -> (i32, i32) {
    %c0_i32 = arith.constant 0 : i32
    %c0_i32_0 = arith.constant 0 : i32
    %c0_i32_1 = arith.constant 0 : i32
    return %c0_i32, %c0_i32_0 : i32, i32
  }
  func.func @transform_2(%arg0: i32) -> (i32, i32) {
    %c0_i32 = arith.constant 0 : i32
    %c0_i32_0 = arith.constant 0 : i32
    %c0_i32_1 = arith.constant 0 : i32
    return %c0_i32, %c0_i32_0 : i32, i32
  }
  func.func @transform_3(%arg0: i32) -> (i32, i32) {
    %c0_i32 = arith.constant 0 : i32
    %c0_i32_0 = arith.constant 0 : i32
    %c0_i32_1 = arith.constant 0 : i32
    return %c0_i32, %c0_i32_0 : i32, i32
  }
  func.func @transform_4(%arg0: i32) -> (i32, i32) {
    %c0_i32 = arith.constant 0 : i32
    %c0_i32_0 = arith.constant 0 : i32
    %c0_i32_1 = arith.constant 0 : i32
    return %c0_i32, %c0_i32_0 : i32, i32
  }
  func.func @transform_5(%arg0: i32) -> (i32, i32) {
    %c0_i32 = arith.constant 0 : i32
    %c0_i32_0 = arith.constant 0 : i32
    %c0_i32_1 = arith.constant 0 : i32
    return %c0_i32, %c0_i32_0 : i32, i32
  }
  func.func @transform_6(%arg0: i32) -> (i32, i32) {
    %c0_i32 = arith.constant 0 : i32
    %c0_i32_0 = arith.constant 0 : i32
    %c0_i32_1 = arith.constant 0 : i32
    return %c0_i32, %c0_i32_0 : i32, i32
  }
  func.func @transform_7(%arg0: i32) -> (i32, i32) {
    %c0_i32 = arith.constant 0 : i32
    %c0_i32_0 = arith.constant 0 : i32
    %c0_i32_1 = arith.constant 0 : i32
    return %c0_i32, %c0_i32_0 : i32, i32
  }
}

</mosaic_0001>

<llo_original>
// kernel: tpu_custom_call.1
$region0: #{tpu_custom_call.1}
  #allocation0 [shape = 'u32[]', space=smem, size = 0x4, offset = 0x4, fixed_abs, tag = 'smem constant byte address 0x4 - core index']
  #allocation1 [shape = 'u32[144,128]{1,0:T(1,128)}', space=vmem, size = 0x12000, scoped, tag = 'internal scratch']
  %s0 = inlined_call_operand.hbm [shape: f32[8,128], index: 0, kind: input, shape index: {}]
  %s1 = inlined_call_operand.hbm [shape: f32[128,512], index: 1, kind: input, shape index: {}]
  %s2 = inlined_call_operand.hbm [shape: f32[1,512], index: 2, kind: input, shape index: {}]
  %s3 = inlined_call_operand.vmem [shape: f32[1,512], index: 3, kind: input, shape index: {}]
  %s4 = inlined_call_operand.hbm [shape: f32[512,256], index: 4, kind: input, shape index: {}]
  %s5 = inlined_call_operand.vmem [shape: f32[1,256], index: 5, kind: input, shape index: {}]
  %s6 = inlined_call_operand.vmem [shape: f32[1,256], index: 6, kind: input, shape index: {}]
  %s7 = inlined_call_operand.hbm [shape: f32[8,256], index: 7, kind: output, shape index: {}]
  %s8 = sld [smem:[#allocation0]]
  $region54: #{tpu_custom_call.1} parent=0
    _
  %s10 = ssub.s32 1, %s8
  %s11 = scalar_select 0, %s10, %s8
  $region1: #{tpu_custom_call.1} parent=0
    #allocation2 [shape = 'u8[4096]{0}', space=vmem, size = 0x1000, scoped, tag = 'input window, operand 0, single buffered']
    #allocation3 [shape = 's32[1]{0}', space=sflag, size = 0x4, scoped, tag = 'scoped memory for tpu_custom_call.1']
    #allocation4 [shape = 's32[1]{0}', space=sflag, size = 0x4, scoped, tag = 'scoped memory for tpu_custom_call.1']
    #allocation5 [shape = 'u8[262144]{0}', space=vmem, size = 0x40000, scoped, tag = 'input window, operand 1, single buffered']
    #allocation6 [shape = 's32[1]{0}', space=sflag, size = 0x4, scoped, tag = 'scoped memory for tpu_custom_call.1']
    #allocation7 [shape = 'u8[2048]{0}', space=vmem, size = 0x800, scoped, tag = 'input window, operand 2, single buffered']
    #allocation8 [shape = 'u8[524288]{0}', space=vmem, size = 0x80000, scoped, tag = 'input window, operand 4, single buffered']
    #allocation9 [shape = 's32[1]{0}', space=sflag, size = 0x4, scoped, tag = 'scoped memory for tpu_custom_call.1']
    #allocation10 [shape = 'u8[8192]{0}', space=vmem, size = 0x2000, scoped, tag = 'output window, operand 0, single buffered']
    %12 = vsyncpa [#allocation3], 0
    %13 = vsyncpa [#allocation6], 0
    %14 = vsyncpa [#allocation9], 0
    %15 = vsyncpa [#allocation4], 0
    // Predicated region
    $region2: #{tpu_custom_call.1} parent=1 // pred_check
      _
    $region3: #{tpu_custom_call.1} parent=1 // pred_check_branch
      %17 = sbr.rel (0) target = $region5
    $region4: #{tpu_custom_call.1} parent=1 // pred_region
      %s19 = ssub.s32 128, 128
      %20 = vsyncadd [#allocation3], %s19
      %s22 = sshll.u32 [#allocation2], 4
      %s23 = int_to_ptr.vmem [resolvable:$true] %s22
      %25 = dma.hbm_to_vmem [thread:$0]  %s0, 128, %s23, [#allocation3]
    $region5: #{tpu_custom_call.1} parent=1 // pred_fallthru
      _
    // Predicated region
    $region6: #{tpu_custom_call.1} parent=1 // pred_check
      _
    $region7: #{tpu_custom_call.1} parent=1 // pred_check_branch
      %27 = sbr.rel (0) target = $region9
    $region8: #{tpu_custom_call.1} parent=1 // pred_region
      %s29 = ssub.s32 8192, 8192
      %30 = vsyncadd [#allocation6], %s29
      %s31 = sshll.u32 [#allocation5], 4
      %s32 = int_to_ptr.vmem [resolvable:$true] %s31
      %37 = dma.hbm_to_vmem [thread:$0]  %s1, 8192, %s32, [#allocation6], 512, 512, 32
    $region9: #{tpu_custom_call.1} parent=1 // pred_fallthru
      _
    // Predicated region
    $region10: #{tpu_custom_call.1} parent=1 // pred_check
      _
    $region11: #{tpu_custom_call.1} parent=1 // pred_check_branch
      %39 = sbr.rel (0) target = $region13
    $region12: #{tpu_custom_call.1} parent=1 // pred_region
      %s41 = ssub.s32 64, 64
      %42 = vsyncadd [#allocation6], %s41
      %s44 = sshll.u32 [#allocation7], 4
      %s45 = int_to_ptr.vmem [resolvable:$true] %s44
      %47 = dma.hbm_to_vmem [thread:$0]  %s2, 64, %s45, [#allocation6]
    $region13: #{tpu_custom_call.1} parent=1 // pred_fallthru
      _
    // Predicated region
    $region14: #{tpu_custom_call.1} parent=1 // pred_check
      _
    $region15: #{tpu_custom_call.1} parent=1 // pred_check_branch
      %49 = sbr.rel (0) target = $region17
    $region16: #{tpu_custom_call.1} parent=1 // pred_region
      _
    $region17: #{tpu_custom_call.1} parent=1 // pred_fallthru
      _
    // Predicated region
    $region18: #{tpu_custom_call.1} parent=1 // pred_check
      _
    $region19: #{tpu_custom_call.1} parent=1 // pred_check_branch
      %51 = sbr.rel (0) target = $region21
    $region20: #{tpu_custom_call.1} parent=1 // pred_region
      %s53 = ssub.s32 16384, 16384
      %54 = vsyncadd [#allocation9], %s53
      %s55 = sshll.u32 [#allocation8], 4
      %s56 = int_to_ptr.vmem [resolvable:$true] %s55
      %61 = dma.hbm_to_vmem [thread:$0]  %s4, 16384, %s56, [#allocation9], 256, 256, 16
    $region21: #{tpu_custom_call.1} parent=1 // pred_fallthru
      _
    // Predicated region
    $region22: #{tpu_custom_call.1} parent=1 // pred_check
      _
    $region23: #{tpu_custom_call.1} parent=1 // pred_check_branch
      %63 = sbr.rel (0) target = $region25
    $region24: #{tpu_custom_call.1} parent=1 // pred_region
      _
    $region25: #{tpu_custom_call.1} parent=1 // pred_fallthru
      _
    // Predicated region
    $region26: #{tpu_custom_call.1} parent=1 // pred_check
      _
    $region27: #{tpu_custom_call.1} parent=1 // pred_check_branch
      %65 = sbr.rel (0) target = $region29
    $region28: #{tpu_custom_call.1} parent=1 // pred_region
      _
    $region29: #{tpu_custom_call.1} parent=1 // pred_fallthru
      _
    // Predicated region
    $region30: #{tpu_custom_call.1} parent=1 // pred_check
      _
    $region31: #{tpu_custom_call.1} parent=1 // pred_check_branch
      %67 = sbr.rel (0) target = $region33
    $region32: #{tpu_custom_call.1} parent=1 // pred_region
      %68 = dma.done [#allocation3], 128
    $region33: #{tpu_custom_call.1} parent=1 // pred_fallthru
      _
    // Predicated region
    $region34: #{tpu_custom_call.1} parent=1 // pred_check
      _
    $region35: #{tpu_custom_call.1} parent=1 // pred_check_branch
      %70 = sbr.rel (0) target = $region37
    $region36: #{tpu_custom_call.1} parent=1 // pred_region
      %71 = dma.done [#allocation6], 8192
    $region37: #{tpu_custom_call.1} parent=1 // pred_fallthru
      _
    // Predicated region
    $region38: #{tpu_custom_call.1} parent=1 // pred_check
      _
    $region39: #{tpu_custom_call.1} parent=1 // pred_check_branch
      %73 = sbr.rel (0) target = $region41
    $region40: #{tpu_custom_call.1} parent=1 // pred_region
      %74 = dma.done [#allocation6], 64
    $region41: #{tpu_custom_call.1} parent=1 // pred_fallthru
      _
    // Predicated region
    $region42: #{tpu_custom_call.1} parent=1 // pred_check
      _
    $region43: #{tpu_custom_call.1} parent=1 // pred_check_branch
      %76 = sbr.rel (0) target = $region45
    $region44: #{tpu_custom_call.1} parent=1 // pred_region
      %77 = dma.done [#allocation9], 16384
    $region45: #{tpu_custom_call.1} parent=1 // pred_fallthru
      _
    %v78 = vld [vmem:[#allocation2] sm:$0xff]
    %v79 = vld [vmem:[#allocation5] sm:$0xff]
    %v80 = vld [vmem:[#allocation5 + $0x8] sm:$0xff]
    %v81 = vld [vmem:[#allocation5 + $0x10] sm:$0xff]
    %v82 = vld [vmem:[#allocation5 + $0x18] sm:$0xff]
    %v83 = vld [vmem:[#allocation5 + $0x20] sm:$0xff]
    %v84 = vld [vmem:[#allocation5 + $0x28] sm:$0xff]
    %v85 = vld [vmem:[#allocation5 + $0x30] sm:$0xff]
    %v86 = vld [vmem:[#allocation5 + $0x38] sm:$0xff]
    %v87 = vld [vmem:[#allocation5 + $0x40] sm:$0xff]
    %v88 = vld [vmem:[#allocation5 + $0x48] sm:$0xff]
    %v89 = vld [vmem:[#allocation5 + $0x50] sm:$0xff]
    %v90 = vld [vmem:[#allocation5 + $0x58] sm:$0xff]
    %v91 = vld [vmem:[#allocation5 + $0x60] sm:$0xff]
    %v92 = vld [vmem:[#allocation5 + $0x68] sm:$0xff]
    %v93 = vld [vmem:[#allocation5 + $0x70] sm:$0xff]
    %v94 = vld [vmem:[#allocation5 + $0x78] sm:$0xff]
    %v95 = vld [vmem:[#allocation5 + $0x80] sm:$0xff]
    %v96 = vld [vmem:[#allocation5 + $0x88] sm:$0xff]
    %v97 = vld [vmem:[#allocation5 + $0x90] sm:$0xff]
    %v98 = vld [vmem:[#allocation5 + $0x98] sm:$0xff]
    %v99 = vld [vmem:[#allocation5 + $0xa0] sm:$0xff]
    %v100 = vld [vmem:[#allocation5 + $0xa8] sm:$0xff]
    %v101 = vld [vmem:[#allocation5 + $0xb0] sm:$0xff]
    %v102 = vld [vmem:[#allocation5 + $0xb8] sm:$0xff]
    %v103 = vld [vmem:[#allocation5 + $0xc0] sm:$0xff]
    %v104 = vld [vmem:[#allocation5 + $0xc8] sm:$0xff]
    %v105 = vld [vmem:[#allocation5 + $0xd0] sm:$0xff]
    %v106 = vld [vmem:[#allocation5 + $0xd8] sm:$0xff]
    %v107 = vld [vmem:[#allocation5 + $0xe0] sm:$0xff]
    %v108 = vld [vmem:[#allocation5 + $0xe8] sm:$0xff]
    %v109 = vld [vmem:[#allocation5 + $0xf0] sm:$0xff]
    %v110 = vld [vmem:[#allocation5 + $0xf8] sm:$0xff]
    %v111 = vld [vmem:[#allocation5 + $0x100] sm:$0xff]
    %v112 = vld [vmem:[#allocation5 + $0x108] sm:$0xff]
    %v113 = vld [vmem:[#allocation5 + $0x110] sm:$0xff]
    %v114 = vld [vmem:[#allocation5 + $0x118] sm:$0xff]
    %v115 = vld [vmem:[#allocation5 + $0x120] sm:$0xff]
    %v116 = vld [vmem:[#allocation5 + $0x128] sm:$0xff]
    %v117 = vld [vmem:[#allocation5 + $0x130] sm:$0xff]
    %v118 = vld [vmem:[#allocation5 + $0x138] sm:$0xff]
    %v119 = vld [vmem:[#allocation5 + $0x140] sm:$0xff]
    %v120 = vld [vmem:[#allocation5 + $0x148] sm:$0xff]
    %v121 = vld [vmem:[#allocation5 + $0x150] sm:$0xff]
    %v122 = vld [vmem:[#allocation5 + $0x158] sm:$0xff]
    %v123 = vld [vmem:[#allocation5 + $0x160] sm:$0xff]
    %v124 = vld [vmem:[#allocation5 + $0x168] sm:$0xff]
    %v125 = vld [vmem:[#allocation5 + $0x170] sm:$0xff]
    %v126 = vld [vmem:[#allocation5 + $0x178] sm:$0xff]
    %v127 = vld [vmem:[#allocation5 + $0x180] sm:$0xff]
    %v128 = vld [vmem:[#allocation5 + $0x188] sm:$0xff]
    %v129 = vld [vmem:[#allocation5 + $0x190] sm:$0xff]
    %v130 = vld [vmem:[#allocation5 + $0x198] sm:$0xff]
    %v131 = vld [vmem:[#allocation5 + $0x1a0] sm:$0xff]
    %v132 = vld [vmem:[#allocation5 + $0x1a8] sm:$0xff]
    %v133 = vld [vmem:[#allocation5 + $0x1b0] sm:$0xff]
    %v134 = vld [vmem:[#allocation5 + $0x1b8] sm:$0xff]
    %v135 = vld [vmem:[#allocation5 + $0x1c0] sm:$0xff]
    %v136 = vld [vmem:[#allocation5 + $0x1c8] sm:$0xff]
    %v137 = vld [vmem:[#allocation5 + $0x1d0] sm:$0xff]
    %v138 = vld [vmem:[#allocation5 + $0x1d8] sm:$0xff]
    %v139 = vld [vmem:[#allocation5 + $0x1e0] sm:$0xff]
    %v140 = vld [vmem:[#allocation5 + $0x1e8] sm:$0xff]
    %v141 = vld [vmem:[#allocation5 + $0x1f0] sm:$0xff]
    %v142 = vld [vmem:[#allocation5 + $0x1f8] sm:$0xff]
    %143 = vmatprep.subr.mxu0 %v140
    %144 = vmatpush1.msra.mxu0 %v139
    %145 = vmatprep.subr.mxu0 %v136
    %146 = vmatpush1.msra.mxu0 %v135
    %147 = vmatprep.subr.mxu0 %v132
    %148 = vmatpush1.msra.mxu0 %v131
    %149 = vmatprep.subr.mxu0 %v128
    %150 = vmatpush1.msra.mxu0 %v127
    %151 = vmatprep.subr.mxu0 %v124
    %152 = vmatpush1.msra.mxu0 %v123
    %153 = vmatprep.subr.mxu0 %v120
    %154 = vmatpush1.msra.mxu0 %v119
    %155 = vmatprep.subr.mxu0 %v116
    %156 = vmatpush1.msra.mxu0 %v115
    %157 = vmatprep.subr.mxu0 %v112
    %158 = vmatpush1.msra.mxu0 %v111
    %159 = vmatprep.subr.mxu0 %v108
    %160 = vmatpush1.msra.mxu0 %v107
    %161 = vmatprep.subr.mxu0 %v104
    %162 = vmatpush1.msra.mxu0 %v103
    %163 = vmatprep.subr.mxu0 %v100
    %164 = vmatpush1.msra.mxu0 %v99
    %165 = vmatprep.subr.mxu0 %v96
    %166 = vmatpush1.msra.mxu0 %v95
    %167 = vmatprep.subr.mxu0 %v92
    %168 = vmatpush1.msra.mxu0 %v91
    %169 = vmatprep.subr.mxu0 %v88
    %170 = vmatpush1.msra.mxu0 %v87
    %171 = vmatprep.subr.mxu0 %v84
    %172 = vmatpush1.msra.mxu0 %v83
    %173 = vmatprep.subr.mxu0 %v80
    %174 = vmatpush1.msra.mxu0 %v79
    %175 = vmatprep.subr.mxu0 0.0
    %176 = vmatpush2.msra.mxu0 0.0
    %177 = vmatprep.subr.mxu0 0.0
    %178 = vmatpush2.msra.mxu0 0.0
    %179 = vmatprep.subr.mxu0 0.0
    %180 = vmatpush2.msra.mxu0 0.0
    %181 = vmatprep.subr.mxu0 0.0
    %182 = vmatpush2.msra.mxu0 0.0
    %183 = vmatprep.subr.mxu0 0.0
    %184 = vmatpush2.msra.mxu0 0.0
    %185 = vmatprep.subr.mxu0 0.0
    %186 = vmatpush2.msra.mxu0 0.0
    %187 = vmatprep.subr.mxu0 0.0
    %188 = vmatpush2.msra.mxu0 0.0
    %189 = vmatprep.subr.mxu0 0.0
    %190 = vmatpush2.msra.mxu0 0.0
    %191 = vmatprep.subr.mxu0 0.0
    %192 = vmatpush2.msra.mxu0 0.0
    %193 = vmatprep.subr.mxu0 0.0
    %194 = vmatpush2.msra.mxu0 0.0
    %195 = vmatprep.subr.mxu0 0.0
    %196 = vmatpush2.msra.mxu0 0.0
    %197 = vmatprep.subr.mxu0 0.0
    %198 = vmatpush2.msra.mxu0 0.0
    %199 = vmatprep.subr.mxu0 0.0
    %200 = vmatpush2.msra.mxu0 0.0
    %201 = vmatprep.subr.mxu0 0.0
    %202 = vmatpush2.msra.mxu0 0.0
    %203 = vmatprep.subr.mxu0 0.0
    %204 = vmatpush2.msra.mxu0 0.0
    %205 = vmatprep.subr.mxu0 0.0
    %206 = vmatpush2.msra.mxu0 0.0
    %207 = vmatprep.mubr.f32.mxu0 0.0
    %208 = vmatmul.mubr.f32.gmra.mxu0 %v78
    %v209 = vpop.f32.mrf.mxu0
    %v210 = vadd.f32 0.0, %v209
    %v211 = vpop.f32.mrf.mxu0
    %v212 = vadd.f32 0.0, %v211
    %213 = vdwg.mxu0
    %214 = vmatprep.subr.mxu0 %v142
    %215 = vmatpush1.msra.mxu0 %v141
    %216 = vmatprep.subr.mxu0 %v138
    %217 = vmatpush1.msra.mxu0 %v137
    %218 = vmatprep.subr.mxu0 %v134
    %219 = vmatpush1.msra.mxu0 %v133
    %220 = vmatprep.subr.mxu0 %v130
    %221 = vmatpush1.msra.mxu0 %v129
    %222 = vmatprep.subr.mxu0 %v126
    %223 = vmatpush1.msra.mxu0 %v125
    %224 = vmatprep.subr.mxu0 %v122
    %225 = vmatpush1.msra.mxu0 %v121
    %226 = vmatprep.subr.mxu0 %v118
    %227 = vmatpush1.msra.mxu0 %v117
    %228 = vmatprep.subr.mxu0 %v114
    %229 = vmatpush1.msra.mxu0 %v113
    %230 = vmatprep.subr.mxu0 %v110
    %231 = vmatpush1.msra.mxu0 %v109
    %232 = vmatprep.subr.mxu0 %v106
    %233 = vmatpush1.msra.mxu0 %v105
    %234 = vmatprep.subr.mxu0 %v102
    %235 = vmatpush1.msra.mxu0 %v101
    %236 = vmatprep.subr.mxu0 %v98
    %237 = vmatpush1.msra.mxu0 %v97
    %238 = vmatprep.subr.mxu0 %v94
    %239 = vmatpush1.msra.mxu0 %v93
    %240 = vmatprep.subr.mxu0 %v90
    %241 = vmatpush1.msra.mxu0 %v89
    %242 = vmatprep.subr.mxu0 %v86
    %243 = vmatpush1.msra.mxu0 %v85
    %244 = vmatprep.subr.mxu0 %v82
    %245 = vmatpush1.msra.mxu0 %v81
    %246 = vmatprep.subr.mxu0 0.0
    %247 = vmatpush2.msra.mxu0 0.0
    %248 = vmatprep.subr.mxu0 0.0
    %249 = vmatpush2.msra.mxu0 0.0
    %250 = vmatprep.subr.mxu0 0.0
    %251 = vmatpush2.msra.mxu0 0.0
    %252 = vmatprep.subr.mxu0 0.0
    %253 = vmatpush2.msra.mxu0 0.0
    %254 = vmatprep.subr.mxu0 0.0
    %255 = vmatpush2.msra.mxu0 0.0
    %256 = vmatprep.subr.mxu0 0.0
    %257 = vmatpush2.msra.mxu0 0.0
    %258 = vmatprep.subr.mxu0 0.0
    %259 = vmatpush2.msra.mxu0 0.0
    %260 = vmatprep.subr.mxu0 0.0
    %261 = vmatpush2.msra.mxu0 0.0
    %262 = vmatprep.subr.mxu0 0.0
    %263 = vmatpush2.msra.mxu0 0.0
    %264 = vmatprep.subr.mxu0 0.0
    %265 = vmatpush2.msra.mxu0 0.0
    %266 = vmatprep.subr.mxu0 0.0
    %267 = vmatpush2.msra.mxu0 0.0
    %268 = vmatprep.subr.mxu0 0.0
    %269 = vmatpush2.msra.mxu0 0.0
    %270 = vmatprep.subr.mxu0 0.0
    %271 = vmatpush2.msra.mxu0 0.0
    %272 = vmatprep.subr.mxu0 0.0
    %273 = vmatpush2.msra.mxu0 0.0
    %274 = vmatprep.subr.mxu0 0.0
    %275 = vmatpush2.msra.mxu0 0.0
    %276 = vmatprep.subr.mxu0 0.0
    %277 = vmatpush2.msra.mxu0 0.0
    %278 = vmatprep.mubr.f32.mxu0 0.0
    %279 = vmatmul.mubr.f32.gmra.mxu0 %v78
    %v280 = vpop.f32.mrf.mxu0
    %v281 = vadd.f32 0.0, %v280
    %v282 = vpop.f32.mrf.mxu0
    %v283 = vadd.f32 0.0, %v282
    %284 = vdwg.mxu0
    %v285 = vld [vmem:[#allocation7] sm:$0xf]
    %v286 = vld [vmem:[%s3] sm:$0xf]
    %v287 = vrot.slane %v210, 4
    %v288 = vadd.f32 %v210, %v287
    %v289 = vrot.slane %v288, 2
    %v290 = vadd.f32 %v288, %v289
    %v291 = vrot.slane %v290, 1
    %v292 = vadd.f32 %v290, %v291
    %v293 = vrot.slane %v212, 4
    %v294 = vadd.f32 %v212, %v293
    %v295 = vrot.slane %v294, 2
    %v296 = vadd.f32 %v294, %v295
    %v297 = vrot.slane %v296, 1
    %v298 = vadd.f32 %v296, %v297
    %v299 = vrot.slane %v281, 4
    %v300 = vadd.f32 %v281, %v299
    %v301 = vrot.slane %v300, 2
    %v302 = vadd.f32 %v300, %v301
    %v303 = vrot.slane %v302, 1
    %v304 = vadd.f32 %v302, %v303
    %v305 = vrot.slane %v283, 4
    %v306 = vadd.f32 %v283, %v305
    %v307 = vrot.slane %v306, 2
    %v308 = vadd.f32 %v306, %v307
    %v309 = vrot.slane %v308, 1
    %v310 = vadd.f32 %v308, %v309
    %v311 = vmul.f32 %v292, 0.2
    %v312 = vmul.f32 %v298, 0.2
    %v313 = vmul.f32 %v304, 0.2
    %v314 = vmul.f32 %v310, 0.2
    %v315 = vmul.f32 %v210, %v210
    %v316 = vmul.f32 %v212, %v212
    %v317 = vmul.f32 %v281, %v281
    %v318 = vmul.f32 %v283, %v283
    %v319 = vrot.slane %v315, 4
    %v320 = vadd.f32 %v315, %v319
    %v321 = vrot.slane %v320, 2
    %v322 = vadd.f32 %v320, %v321
    %v323 = vrot.slane %v322, 1
    %v324 = vadd.f32 %v322, %v323
    %v325 = vrot.slane %v316, 4
    %v326 = vadd.f32 %v316, %v325
    %v327 = vrot.slane %v326, 2
    %v328 = vadd.f32 %v326, %v327
    %v329 = vrot.slane %v328, 1
    %v330 = vadd.f32 %v328, %v329
    %v331 = vrot.slane %v317, 4
    %v332 = vadd.f32 %v317, %v331
    %v333 = vrot.slane %v332, 2
    %v334 = vadd.f32 %v332, %v333
    %v335 = vrot.slane %v334, 1
    %v336 = vadd.f32 %v334, %v335
    %v337 = vrot.slane %v318, 4
    %v338 = vadd.f32 %v318, %v337
    %v339 = vrot.slane %v338, 2
    %v340 = vadd.f32 %v338, %v339
    %v341 = vrot.slane %v340, 1
    %v342 = vadd.f32 %v340, %v341
    %v343 = vmul.f32 %v324, 0.2
    %v344 = vmul.f32 %v330, 0.2
    %v345 = vmul.f32 %v336, 0.2
    %v346 = vmul.f32 %v342, 0.2
    %v347 = vmul.f32 %v311, %v311
    %v348 = vmul.f32 %v312, %v312
    %v349 = vmul.f32 %v313, %v313
    %v350 = vmul.f32 %v314, %v314
    %v351 = vsub.f32 %v343, %v347
    %v352 = vsub.f32 %v344, %v348
    %v353 = vsub.f32 %v345, %v349
    %v354 = vsub.f32 %v346, %v350
    %v355 = vmax.f32 %v351, 0.0
    %v356 = vmax.f32 %v352, 0.0
    %v357 = vmax.f32 %v353, 0.0
    %v358 = vmax.f32 %v354, 0.0
    %v359 = vadd.f32 %v355, 1e-05
    %v360 = vadd.f32 %v356, 1e-05
    %v361 = vadd.f32 %v357, 1e-05
    %v362 = vadd.f32 %v358, 1e-05
    %v363 = vrsqrt.pop %v359
    %v364 = vrsqrt.pop %v360
    %v365 = vrsqrt.pop %v361
    %v366 = vrsqrt.pop %v362
    %v371 = vcombine.low %v363, %v364
    %v372 = vcombine.low %v365, %v366
    %v374 = vunpack.c.l.s4 1966171168
    %v375 = vunpack.c.0.s8 %v374
    %v376 = vlaneseq
    %v377 = vshrl.u32 %v376, 7
    %v378 = vsub.s32 %v375, %v377
    %v379 = vrot.slane %v371, %v378
    %v381 = vunpack.c.l.s4 1966171168
    %v382 = vunpack.c.0.s8 %v381
    %v383 = vlaneseq
    %v384 = vshrl.u32 %v383, 7
    %v385 = vsub.s32 %v382, %v384
    %v386 = vrot.slane %v372, %v385
    %v387 = vcombine.low %v379, %v386
    %v389 = vunpack.c.l.s4 1966171168
    %v390 = vunpack.c.0.s8 %v389
    %v391 = vlaneseq
    %v392 = vshrl.u32 %v391, 7
    %v393 = vsub.s32 %v390, %v392
    %v394 = vrot.slane %v387, %v393
    %v396 = vmul.f32 %v285, %v394
    %v398 = vlaneseq
    %v399 = vshrl.u32 %v398, 7
    %v400 = vsub.s32 0, %v399
    %v401 = vrot.slane %v396, %v400
    %v402 = vlaneseq
    %v403 = vshrl.u32 %v402, 7
    %v404 = vsub.s32 1, %v403
    %v405 = vrot.slane %v396, %v404
    %v406 = vlaneseq
    %v407 = vshrl.u32 %v406, 7
    %v408 = vsub.s32 2, %v407
    %v409 = vrot.slane %v396, %v408
    %v410 = vlaneseq
    %v411 = vshrl.u32 %v410, 7
    %v412 = vsub.s32 3, %v411
    %v413 = vrot.slane %v396, %v412
    %v418 = vmul.f32 %v311, %v401
    %v419 = vmul.f32 %v312, %v405
    %v420 = vmul.f32 %v313, %v409
    %v421 = vmul.f32 %v314, %v413
    %v426 = vcombine.low %v418, %v419
    %v427 = vcombine.low %v420, %v421
    %v429 = vunpack.c.l.s4 1966171168
    %v430 = vunpack.c.0.s8 %v429
    %v431 = vlaneseq
    %v432 = vshrl.u32 %v431, 7
    %v433 = vsub.s32 %v430, %v432
    %v434 = vrot.slane %v426, %v433
    %v436 = vunpack.c.l.s4 1966171168
    %v437 = vunpack.c.0.s8 %v436
    %v438 = vlaneseq
    %v439 = vshrl.u32 %v438, 7
    %v440 = vsub.s32 %v437, %v439
    %v441 = vrot.slane %v427, %v440
    %v442 = vcombine.low %v434, %v441
    %v444 = vunpack.c.l.s4 1966171168
    %v445 = vunpack.c.0.s8 %v444
    %v446 = vlaneseq
    %v447 = vshrl.u32 %v446, 7
    %v448 = vsub.s32 %v445, %v447
    %v449 = vrot.slane %v442, %v448
    %v451 = vsub.f32 %v286, %v449
    %v452 = vmul.f32 %v210, %v401
    %v453 = vmul.f32 %v212, %v405
    %v454 = vmul.f32 %v281, %v409
    %v455 = vmul.f32 %v283, %v413
    %v457 = vlaneseq
    %v458 = vshrl.u32 %v457, 7
    %v459 = vsub.s32 0, %v458
    %v460 = vrot.slane %v451, %v459
    %v461 = vlaneseq
    %v462 = vshrl.u32 %v461, 7
    %v463 = vsub.s32 1, %v462
    %v464 = vrot.slane %v451, %v463
    %v465 = vlaneseq
    %v466 = vshrl.u32 %v465, 7
    %v467 = vsub.s32 2, %v466
    %v468 = vrot.slane %v451, %v467
    %v469 = vlaneseq
    %v470 = vshrl.u32 %v469, 7
    %v471 = vsub.s32 3, %v470
    %v472 = vrot.slane %v451, %v471
    %v477 = vadd.f32 %v452, %v460
    %v478 = vadd.f32 %v453, %v464
    %v479 = vadd.f32 %v454, %v468
    %v480 = vadd.f32 %v455, %v472
    %v481 = vmul.f32 %v477, 0.2
    %v482 = vmul.f32 %v478, 0.2
    %v483 = vmul.f32 %v479, 0.2
    %v484 = vmul.f32 %v480, 0.2
    %v485 = vmax.f32 %v477, %v481
    %v486 = vmax.f32 %v478, %v482
    %v487 = vmax.f32 %v479, %v483
    %v488 = vmax.f32 %v480, %v484
    %v489 = vld [vmem:[#allocation8] sm:$0xff]
    %v490 = vld [vmem:[#allocation8 + $0x8] sm:$0xff]
    %v491 = vld [vmem:[#allocation8 + $0x10] sm:$0xff]
    %v492 = vld [vmem:[#allocation8 + $0x18] sm:$0xff]
    %v493 = vld [vmem:[#allocation8 + $0x20] sm:$0xff]
    %v494 = vld [vmem:[#allocation8 + $0x28] sm:$0xff]
    %v495 = vld [vmem:[#allocation8 + $0x30] sm:$0xff]
    %v496 = vld [vmem:[#allocation8 + $0x38] sm:$0xff]
    %v497 = vld [vmem:[#allocation8 + $0x40] sm:$0xff]
    %v498 = vld [vmem:[#allocation8 + $0x48] sm:$0xff]
    %v499 = vld [vmem:[#allocation8 + $0x50] sm:$0xff]
    %v500 = vld [vmem:[#allocation8 + $0x58] sm:$0xff]
    %v501 = vld [vmem:[#allocation8 + $0x60] sm:$0xff]
    %v502 = vld [vmem:[#allocation8 + $0x68] sm:$0xff]
    %v503 = vld [vmem:[#allocation8 + $0x70] sm:$0xff]
    %v504 = vld [vmem:[#allocation8 + $0x78] sm:$0xff]
    %v505 = vld [vmem:[#allocation8 + $0x80] sm:$0xff]
    %v506 = vld [vmem:[#allocation8 + $0x88] sm:$0xff]
    %v507 = vld [vmem:[#allocation8 + $0x90] sm:$0xff]
    %v508 = vld [vmem:[#allocation8 + $0x98] sm:$0xff]
    %v509 = vld [vmem:[#allocation8 + $0xa0] sm:$0xff]
    %v510 = vld [vmem:[#allocation8 + $0xa8] sm:$0xff]
    %v511 = vld [vmem:[#allocation8 + $0xb0] sm:$0xff]
    %v512 = vld [vmem:[#allocation8 + $0xb8] sm:$0xff]
    %v513 = vld [vmem:[#allocation8 + $0xc0] sm:$0xff]
    %v514 = vld [vmem:[#allocation8 + $0xc8] sm:$0xff]
    %v515 = vld [vmem:[#allocation8 + $0xd0] sm:$0xff]
    %v516 = vld [vmem:[#allocation8 + $0xd8] sm:$0xff]
    %v517 = vld [vmem:[#allocation8 + $0xe0] sm:$0xff]
    %v518 = vld [vmem:[#allocation8 + $0xe8] sm:$0xff]
    %v519 = vld [vmem:[#allocation8 + $0xf0] sm:$0xff]
    %v520 = vld [vmem:[#allocation8 + $0xf8] sm:$0xff]
    %v521 = vld [vmem:[#allocation8 + $0x100] sm:$0xff]
    %v522 = vld [vmem:[#allocation8 + $0x108] sm:$0xff]
    %v523 = vld [vmem:[#allocation8 + $0x110] sm:$0xff]
    %v524 = vld [vmem:[#allocation8 + $0x118] sm:$0xff]
    %v525 = vld [vmem:[#allocation8 + $0x120] sm:$0xff]
    %v526 = vld [vmem:[#allocation8 + $0x128] sm:$0xff]
    %v527 = vld [vmem:[#allocation8 + $0x130] sm:$0xff]
    %v528 = vld [vmem:[#allocation8 + $0x138] sm:$0xff]
    %v529 = vld [vmem:[#allocation8 + $0x140] sm:$0xff]
    %v530 = vld [vmem:[#allocation8 + $0x148] sm:$0xff]
    %v531 = vld [vmem:[#allocation8 + $0x150] sm:$0xff]
    %v532 = vld [vmem:[#allocation8 + $0x158] sm:$0xff]
    %v533 = vld [vmem:[#allocation8 + $0x160] sm:$0xff]
    %v534 = vld [vmem:[#allocation8 + $0x168] sm:$0xff]
    %v535 = vld [vmem:[#allocation8 + $0x170] sm:$0xff]
    %v536 = vld [vmem:[#allocation8 + $0x178] sm:$0xff]
    %v537 = vld [vmem:[#allocation8 + $0x180] sm:$0xff]
    %v538 = vld [vmem:[#allocation8 + $0x188] sm:$0xff]
    %v539 = vld [vmem:[#allocation8 + $0x190] sm:$0xff]
    %v540 = vld [vmem:[#allocation8 + $0x198] sm:$0xff]
    %v541 = vld [vmem:[#allocation8 + $0x1a0] sm:$0xff]
    %v542 = vld [vmem:[#allocation8 + $0x1a8] sm:$0xff]
    %v543 = vld [vmem:[#allocation8 + $0x1b0] sm:$0xff]
    %v544 = vld [vmem:[#allocation8 + $0x1b8] sm:$0xff]
    %v545 = vld [vmem:[#allocation8 + $0x1c0] sm:$0xff]
    %v546 = vld [vmem:[#allocation8 + $0x1c8] sm:$0xff]
    %v547 = vld [vmem:[#allocation8 + $0x1d0] sm:$0xff]
    %v548 = vld [vmem:[#allocation8 + $0x1d8] sm:$0xff]
    %v549 = vld [vmem:[#allocation8 + $0x1e0] sm:$0xff]
    %v550 = vld [vmem:[#allocation8 + $0x1e8] sm:$0xff]
    %v551 = vld [vmem:[#allocation8 + $0x1f0] sm:$0xff]
    %v552 = vld [vmem:[#allocation8 + $0x1f8] sm:$0xff]
    %v553 = vld [vmem:[#allocation8 + $0x200] sm:$0xff]
    %v554 = vld [vmem:[#allocation8 + $0x208] sm:$0xff]
    %v555 = vld [vmem:[#allocation8 + $0x210] sm:$0xff]
    %v556 = vld [vmem:[#allocation8 + $0x218] sm:$0xff]
    %v557 = vld [vmem:[#allocation8 + $0x220] sm:$0xff]
    %v558 = vld [vmem:[#allocation8 + $0x228] sm:$0xff]
    %v559 = vld [vmem:[#allocation8 + $0x230] sm:$0xff]
    %v560 = vld [vmem:[#allocation8 + $0x238] sm:$0xff]
    %v561 = vld [vmem:[#allocation8 + $0x240] sm:$0xff]
    %v562 = vld [vmem:[#allocation8 + $0x248] sm:$0xff]
    %v563 = vld [vmem:[#allocation8 + $0x250] sm:$0xff]
    %v564 = vld [vmem:[#allocation8 + $0x258] sm:$0xff]
    %v565 = vld [vmem:[#allocation8 + $0x260] sm:$0xff]
    %v566 = vld [vmem:[#allocation8 + $0x268] sm:$0xff]
    %v567 = vld [vmem:[#allocation8 + $0x270] sm:$0xff]
    %v568 = vld [vmem:[#allocation8 + $0x278] sm:$0xff]
    %v569 = vld [vmem:[#allocation8 + $0x280] sm:$0xff]
    %v570 = vld [vmem:[#allocation8 + $0x288] sm:$0xff]
    %v571 = vld [vmem:[#allocation8 + $0x290] sm:$0xff]
    %v572 = vld [vmem:[#allocation8 + $0x298] sm:$0xff]
    %v573 = vld [vmem:[#allocation8 + $0x2a0] sm:$0xff]
    %v574 = vld [vmem:[#allocation8 + $0x2a8] sm:$0xff]
    %v575 = vld [vmem:[#allocation8 + $0x2b0] sm:$0xff]
    %v576 = vld [vmem:[#allocation8 + $0x2b8] sm:$0xff]
    %v577 = vld [vmem:[#allocation8 + $0x2c0] sm:$0xff]
    %v578 = vld [vmem:[#allocation8 + $0x2c8] sm:$0xff]
    %v579 = vld [vmem:[#allocation8 + $0x2d0] sm:$0xff]
    %v580 = vld [vmem:[#allocation8 + $0x2d8] sm:$0xff]
    %v581 = vld [vmem:[#allocation8 + $0x2e0] sm:$0xff]
    %v582 = vld [vmem:[#allocation8 + $0x2e8] sm:$0xff]
    %v583 = vld [vmem:[#allocation8 + $0x2f0] sm:$0xff]
    %v584 = vld [vmem:[#allocation8 + $0x2f8] sm:$0xff]
    %v585 = vld [vmem:[#allocation8 + $0x300] sm:$0xff]
    %v586 = vld [vmem:[#allocation8 + $0x308] sm:$0xff]
    %v587 = vld [vmem:[#allocation8 + $0x310] sm:$0xff]
    %v588 = vld [vmem:[#allocation8 + $0x318] sm:$0xff]
    %v589 = vld [vmem:[#allocation8 + $0x320] sm:$0xff]
    %v590 = vld [vmem:[#allocation8 + $0x328] sm:$0xff]
    %v591 = vld [vmem:[#allocation8 + $0x330] sm:$0xff]
    %v592 = vld [vmem:[#allocation8 + $0x338] sm:$0xff]
    %v593 = vld [vmem:[#allocation8 + $0x340] sm:$0xff]
    %v594 = vld [vmem:[#allocation8 + $0x348] sm:$0xff]
    %v595 = vld [vmem:[#allocation8 + $0x350] sm:$0xff]
    %v596 = vld [vmem:[#allocation8 + $0x358] sm:$0xff]
    %v597 = vld [vmem:[#allocation8 + $0x360] sm:$0xff]
    %v598 = vld [vmem:[#allocation8 + $0x368] sm:$0xff]
    %v599 = vld [vmem:[#allocation8 + $0x370] sm:$0xff]
    %v600 = vld [vmem:[#allocation8 + $0x378] sm:$0xff]
    %v601 = vld [vmem:[#allocation8 + $0x380] sm:$0xff]
    %v602 = vld [vmem:[#allocation8 + $0x388] sm:$0xff]
    %v603 = vld [vmem:[#allocation8 + $0x390] sm:$0xff]
    %v604 = vld [vmem:[#allocation8 + $0x398] sm:$0xff]
    %v605 = vld [vmem:[#allocation8 + $0x3a0] sm:$0xff]
    %v606 = vld [vmem:[#allocation8 + $0x3a8] sm:$0xff]
    %v607 = vld [vmem:[#allocation8 + $0x3b0] sm:$0xff]
    %v608 = vld [vmem:[#allocation8 + $0x3b8] sm:$0xff]
    %v609 = vld [vmem:[#allocation8 + $0x3c0] sm:$0xff]
    %v610 = vld [vmem:[#allocation8 + $0x3c8] sm:$0xff]
    %v611 = vld [vmem:[#allocation8 + $0x3d0] sm:$0xff]
    %v612 = vld [vmem:[#allocation8 + $0x3d8] sm:$0xff]
    %v613 = vld [vmem:[#allocation8 + $0x3e0] sm:$0xff]
    %v614 = vld [vmem:[#allocation8 + $0x3e8] sm:$0xff]
    %v615 = vld [vmem:[#allocation8 + $0x3f0] sm:$0xff]
    %v616 = vld [vmem:[#allocation8 + $0x3f8] sm:$0xff]
    %617 = vmatprep.subr.mxu0 %v520
    %618 = vmatpush1.msra.mxu0 %v519
    %619 = vmatprep.subr.mxu0 %v518
    %620 = vmatpush1.msra.mxu0 %v517
    %621 = vmatprep.subr.mxu0 %v516
    %622 = vmatpush1.msra.mxu0 %v515
    %623 = vmatprep.subr.mxu0 %v514
    %624 = vmatpush1.msra.mxu0 %v513
    %625 = vmatprep.subr.mxu0 %v512
    %626 = vmatpush1.msra.mxu0 %v511
    %627 = vmatprep.subr.mxu0 %v510
    %628 = vmatpush1.msra.mxu0 %v509
    %629 = vmatprep.subr.mxu0 %v508
    %630 = vmatpush1.msra.mxu0 %v507
    %631 = vmatprep.subr.mxu0 %v506
    %632 = vmatpush1.msra.mxu0 %v505
    %633 = vmatprep.subr.mxu0 %v504
    %634 = vmatpush1.msra.mxu0 %v503
    %635 = vmatprep.subr.mxu0 %v502
    %636 = vmatpush1.msra.mxu0 %v501
    %637 = vmatprep.subr.mxu0 %v500
    %638 = vmatpush1.msra.mxu0 %v499
    %639 = vmatprep.subr.mxu0 %v498
    %640 = vmatpush1.msra.mxu0 %v497
    %641 = vmatprep.subr.mxu0 %v496
    %642 = vmatpush1.msra.mxu0 %v495
    %643 = vmatprep.subr.mxu0 %v494
    %644 = vmatpush1.msra.mxu0 %v493
    %645 = vmatprep.subr.mxu0 %v492
    %646 = vmatpush1.msra.mxu0 %v491
    %647 = vmatprep.subr.mxu0 %v490
    %648 = vmatpush1.msra.mxu0 %v489
    %649 = vmatprep.subr.mxu0 %v552
    %650 = vmatpush2.msra.mxu0 %v551
    %651 = vmatprep.subr.mxu0 %v550
    %652 = vmatpush2.msra.mxu0 %v549
    %653 = vmatprep.subr.mxu0 %v548
    %654 = vmatpush2.msra.mxu0 %v547
    %655 = vmatprep.subr.mxu0 %v546
    %656 = vmatpush2.msra.mxu0 %v545
    %657 = vmatprep.subr.mxu0 %v544
    %658 = vmatpush2.msra.mxu0 %v543
    %659 = vmatprep.subr.mxu0 %v542
    %660 = vmatpush2.msra.mxu0 %v541
    %661 = vmatprep.subr.mxu0 %v540
    %662 = vmatpush2.msra.mxu0 %v539
    %663 = vmatprep.subr.mxu0 %v538
    %664 = vmatpush2.msra.mxu0 %v537
    %665 = vmatprep.subr.mxu0 %v536
    %666 = vmatpush2.msra.mxu0 %v535
    %667 = vmatprep.subr.mxu0 %v534
    %668 = vmatpush2.msra.mxu0 %v533
    %669 = vmatprep.subr.mxu0 %v532
    %670 = vmatpush2.msra.mxu0 %v531
    %671 = vmatprep.subr.mxu0 %v530
    %672 = vmatpush2.msra.mxu0 %v529
    %673 = vmatprep.subr.mxu0 %v528
    %674 = vmatpush2.msra.mxu0 %v527
    %675 = vmatprep.subr.mxu0 %v526
    %676 = vmatpush2.msra.mxu0 %v525
    %677 = vmatprep.subr.mxu0 %v524
    %678 = vmatpush2.msra.mxu0 %v523
    %679 = vmatprep.subr.mxu0 %v522
    %680 = vmatpush2.msra.mxu0 %v521
    %681 = vmatprep.mubr.f32.mxu0 %v486
    %682 = vmatmul.mubr.f32.gmra.mxu0 %v485
    %v683 = vpop.f32.mrf.mxu0
    %v684 = vadd.f32 0.0, %v683
    %v685 = vpop.f32.mrf.mxu0
    %v686 = vadd.f32 0.0, %v685
    %687 = vdwg.mxu0
    %688 = vmatprep.subr.mxu0 %v584
    %689 = vmatpush1.msra.mxu0 %v583
    %690 = vmatprep.subr.mxu0 %v582
    %691 = vmatpush1.msra.mxu0 %v581
    %692 = vmatprep.subr.mxu0 %v580
    %693 = vmatpush1.msra.mxu0 %v579
    %694 = vmatprep.subr.mxu0 %v578
    %695 = vmatpush1.msra.mxu0 %v577
    %696 = vmatprep.subr.mxu0 %v576
    %697 = vmatpush1.msra.mxu0 %v575
    %698 = vmatprep.subr.mxu0 %v574
    %699 = vmatpush1.msra.mxu0 %v573
    %700 = vmatprep.subr.mxu0 %v572
    %701 = vmatpush1.msra.mxu0 %v571
    %702 = vmatprep.subr.mxu0 %v570
    %703 = vmatpush1.msra.mxu0 %v569
    %704 = vmatprep.subr.mxu0 %v568
    %705 = vmatpush1.msra.mxu0 %v567
    %706 = vmatprep.subr.mxu0 %v566
    %707 = vmatpush1.msra.mxu0 %v565
    %708 = vmatprep.subr.mxu0 %v564
    %709 = vmatpush1.msra.mxu0 %v563
    %710 = vmatprep.subr.mxu0 %v562
    %711 = vmatpush1.msra.mxu0 %v561
    %712 = vmatprep.subr.mxu0 %v560
    %713 = vmatpush1.msra.mxu0 %v559
    %714 = vmatprep.subr.mxu0 %v558
    %715 = vmatpush1.msra.mxu0 %v557
    %716 = vmatprep.subr.mxu0 %v556
    %717 = vmatpush1.msra.mxu0 %v555
    %718 = vmatprep.subr.mxu0 %v554
    %719 = vmatpush1.msra.mxu0 %v553
    %720 = vmatprep.subr.mxu0 %v616
    %721 = vmatpush2.msra.mxu0 %v615
    %722 = vmatprep.subr.mxu0 %v614
    %723 = vmatpush2.msra.mxu0 %v613
    %724 = vmatprep.subr.mxu0 %v612
    %725 = vmatpush2.msra.mxu0 %v611
    %726 = vmatprep.subr.mxu0 %v610
    %727 = vmatpush2.msra.mxu0 %v609
    %728 = vmatprep.subr.mxu0 %v608
    %729 = vmatpush2.msra.mxu0 %v607
    %730 = vmatprep.subr.mxu0 %v606
    %731 = vmatpush2.msra.mxu0 %v605
    %732 = vmatprep.subr.mxu0 %v604
    %733 = vmatpush2.msra.mxu0 %v603
    %734 = vmatprep.subr.mxu0 %v602
    %735 = vmatpush2.msra.mxu0 %v601
    %736 = vmatprep.subr.mxu0 %v600
    %737 = vmatpush2.msra.mxu0 %v599
    %738 = vmatprep.subr.mxu0 %v598
    %739 = vmatpush2.msra.mxu0 %v597
    %740 = vmatprep.subr.mxu0 %v596
    %741 = vmatpush2.msra.mxu0 %v595
    %742 = vmatprep.subr.mxu0 %v594
    %743 = vmatpush2.msra.mxu0 %v593
    %744 = vmatprep.subr.mxu0 %v592
    %745 = vmatpush2.msra.mxu0 %v591
    %746 = vmatprep.subr.mxu0 %v590
    %747 = vmatpush2.msra.mxu0 %v589
    %748 = vmatprep.subr.mxu0 %v588
    %749 = vmatpush2.msra.mxu0 %v587
    %750 = vmatprep.subr.mxu0 %v586
    %751 = vmatpush2.msra.mxu0 %v585
    %752 = vmatprep.mubr.f32.mxu0 %v488
    %753 = vmatmul.mubr.f32.gmra.mxu0 %v487
    %v754 = vpop.f32.mrf.mxu0
    %v755 = vadd.f32 %v684, %v754
    %v756 = vpop.f32.mrf.mxu0
    %v757 = vadd.f32 %v686, %v756
    %758 = vdwg.mxu0
    %v759 = vlaneseq
    %v760 = vshrl.u32 %v759, 7
    %vm761 = vcmp.lt.s32.totalorder %v760, 5
    %v762 = vsel %vm761, 1, 0
    %v763 = vcvt.s32.f32 %v762
    %v764 = vmul.f32 %v755, %v763
    %v765 = vmul.f32 %v757, %v763
    %v766 = vld [vmem:[%s5] sm:$0x3]
    %v767 = vld [vmem:[%s6] sm:$0x3]
    %v768 = vrot.slane %v764, 4
    %v769 = vadd.f32 %v764, %v768
    %v770 = vrot.slane %v769, 2
    %v771 = vadd.f32 %v769, %v770
    %v772 = vrot.slane %v771, 1
    %v773 = vadd.f32 %v771, %v772
    %v774 = vrot.slane %v765, 4
    %v775 = vadd.f32 %v765, %v774
    %v776 = vrot.slane %v775, 2
    %v777 = vadd.f32 %v775, %v776
    %v778 = vrot.slane %v777, 1
    %v779 = vadd.f32 %v777, %v778
    %v780 = vmul.f32 %v773, 0.2
    %v781 = vmul.f32 %v779, 0.2
    %v782 = vmul.f32 %v764, %v764
    %v783 = vmul.f32 %v765, %v765
    %v784 = vrot.slane %v782, 4
    %v785 = vadd.f32 %v782, %v784
    %v786 = vrot.slane %v785, 2
    %v787 = vadd.f32 %v785, %v786
    %v788 = vrot.slane %v787, 1
    %v789 = vadd.f32 %v787, %v788
    %v790 = vrot.slane %v783, 4
    %v791 = vadd.f32 %v783, %v790
    %v792 = vrot.slane %v791, 2
    %v793 = vadd.f32 %v791, %v792
    %v794 = vrot.slane %v793, 1
    %v795 = vadd.f32 %v793, %v794
    %v796 = vmul.f32 %v789, 0.2
    %v797 = vmul.f32 %v795, 0.2
    %v798 = vmul.f32 %v780, %v780
    %v799 = vmul.f32 %v781, %v781
    %v800 = vsub.f32 %v796, %v798
    %v801 = vsub.f32 %v797, %v799
    %v802 = vmax.f32 %v800, 0.0
    %v803 = vmax.f32 %v801, 0.0
    %v804 = vadd.f32 %v802, 1e-05
    %v805 = vadd.f32 %v803, 1e-05
    %v806 = vrsqrt.pop %v804
    %v807 = vrsqrt.pop %v805
    %v810 = vcombine.low %v806, %v807
    %v812 = vunpack.c.l.s4 1966171168
    %v813 = vunpack.c.0.s8 %v812
    %v814 = vlaneseq
    %v815 = vshrl.u32 %v814, 7
    %v816 = vsub.s32 %v813, %v815
    %v817 = vrot.slane %v810, %v816
    %v819 = vunpack.c.l.s4 1966171168
    %v820 = vunpack.c.0.s8 %v819
    %v821 = vlaneseq
    %v822 = vshrl.u32 %v821, 7
    %v823 = vsub.s32 %v820, %v822
    %v824 = vrot.slane %v817, %v823
    %v826 = vmul.f32 %v766, %v824
    %v828 = vlaneseq
    %v829 = vshrl.u32 %v828, 7
    %v830 = vsub.s32 0, %v829
    %v831 = vrot.slane %v826, %v830
    %v832 = vlaneseq
    %v833 = vshrl.u32 %v832, 7
    %v834 = vsub.s32 1, %v833
    %v835 = vrot.slane %v826, %v834
    %v838 = vmul.f32 %v780, %v831
    %v839 = vmul.f32 %v781, %v835
    %v842 = vcombine.low %v838, %v839
    %v844 = vunpack.c.l.s4 1966171168
    %v845 = vunpack.c.0.s8 %v844
    %v846 = vlaneseq
    %v847 = vshrl.u32 %v846, 7
    %v848 = vsub.s32 %v845, %v847
    %v849 = vrot.slane %v842, %v848
    %v851 = vunpack.c.l.s4 1966171168
    %v852 = vunpack.c.0.s8 %v851
    %v853 = vlaneseq
    %v854 = vshrl.u32 %v853, 7
    %v855 = vsub.s32 %v852, %v854
    %v856 = vrot.slane %v849, %v855
    %v858 = vsub.f32 %v767, %v856
    %v859 = vmul.f32 %v755, %v831
    %v860 = vmul.f32 %v757, %v835
    %v862 = vlaneseq
    %v863 = vshrl.u32 %v862, 7
    %v864 = vsub.s32 0, %v863
    %v865 = vrot.slane %v858, %v864
    %v866 = vlaneseq
    %v867 = vshrl.u32 %v866, 7
    %v868 = vsub.s32 1, %v867
    %v869 = vrot.slane %v858, %v868
    %v872 = vadd.f32 %v859, %v865
    %v873 = vadd.f32 %v860, %v869
    %v874 = vmul.f32 %v872, 0.2
    %v875 = vmul.f32 %v873, 0.2
    %v876 = vmax.f32 %v872, %v874
    %v877 = vmax.f32 %v873, %v875
    %878 = vst [vmem:[#allocation10] sm:$0xff] %v876
    %879 = vst [vmem:[#allocation10 + $0x8] sm:$0xff] %v877
    // Predicated region
    $region46: #{tpu_custom_call.1} parent=1 // pred_check
      _
    $region47: #{tpu_custom_call.1} parent=1 // pred_check_branch
      %881 = sbr.rel (0) target = $region49
    $region48: #{tpu_custom_call.1} parent=1 // pred_region
      %s883 = ssub.s32 256, 256
      %884 = vsyncadd [#allocation4], %s883
      %s886 = sshll.u32 [#allocation10], 4
      %s887 = int_to_ptr.vmem [resolvable:$true] %s886
      %889 = dma.vmem_to_hbm [thread:$0]  %s887, 256, %s7, [#allocation4]
    $region49: #{tpu_custom_call.1} parent=1 // pred_fallthru
      _
    // Predicated region
    $region50: #{tpu_custom_call.1} parent=1 // pred_check
      _
    $region51: #{tpu_custom_call.1} parent=1 // pred_check_branch
      %891 = sbr.rel (0) target = $region53
    $region52: #{tpu_custom_call.1} parent=1 // pred_region
      %892 = dma.done [#allocation4], 256
    $region53: #{tpu_custom_call.1} parent=1 // pred_fallthru
      _
    %893 = vsyncpa [#allocation3], 1
    %894 = vsyncpa [#allocation6], 1
    %895 = vsyncpa [#allocation9], 1
    %896 = vsyncpa [#allocation4], 1

</llo_original>
